<compile_context>
chip_gen: v6e
topology: v6e:2x2x1
jax: 0.10.0
libtpu: 0.0.40
codegen_flags: <defaults>
</compile_context>

<pallas_src>
import functools

import jax
import jax.numpy as jnp
from jax import lax
from jax.experimental import pallas as pl
from jax.experimental.pallas import tpu as pltpu

KERNEL = 5  # matches SPBlock3(kernel=5)


def _spblock3_kernel(coord_ref, x_ref, o_ref, *, kernel, H, W):
    """Block is (tc, hw_p): tc flattened (n,c) planes, each plane lane-dense."""
    x = x_ref[...].astype(jnp.float32)
    tc, hw_p = x.shape
    p = kernel // 2

    # Lane coordinates (w, h) come in as a tiny precomputed int32 input row;
    # broadcast once per block (no iota / div / mod on the VALU path).
    w_idx = jnp.broadcast_to(coord_ref[0:1, :], (tc, hw_p))
    h_idx = jnp.broadcast_to(coord_ref[1:2, :], (tc, hw_p))

    acc = x + x                       # d == 0 tap of both pools, fused
    for d in range(1, p + 1):         # static unrolled window taps
        # horizontal +d tap: out[h, w] += x[h, w + d]  (0 outside [0, W))
        rolled = pltpu.roll(x, shift=(-d) % hw_p, axis=1)
        acc = acc + jnp.where(w_idx < (W - d), rolled, 0.0)
        # vertical +d tap:   out[h, w] += x[h + d, w]  (0 outside [0, H))
        rolled = pltpu.roll(x, shift=(-d * W) % hw_p, axis=1)
        acc = acc + jnp.where(h_idx < (H - d), rolled, 0.0)
        # horizontal -d tap: out[h, w] += x[h, w - d]
        rolled = pltpu.roll(x, shift=d % hw_p, axis=1)
        acc = acc + jnp.where(w_idx >= d, rolled, 0.0)
        # vertical -d tap:   out[h, w] += x[h - d, w]
        rolled = pltpu.roll(x, shift=(d * W) % hw_p, axis=1)
        acc = acc + jnp.where(h_idx >= d, rolled, 0.0)

    # avgpool1 + avgpool2 = (sum_h + sum_v) / k   (count_include_pad=True)
    o_ref[...] = (acc * (1.0 / kernel)).astype(o_ref.dtype)


def _chip_config():
    """(dual_core, vmem_limit_bytes, soft_max_block_bytes, hard_max_block_bytes)."""
    kind = ""
    try:
        kind = jax.devices()[0].device_kind.lower()
    except Exception:
        pass
    dual_core = "v7" in kind  # v7x: 2 TensorCores/chip, 64 MiB VMEM per TC

    vmem_phys = None
    try:
        vmem_phys = int(pltpu.get_tpu_info().vmem_capacity_bytes)
    except Exception:
        pass
    if vmem_phys is None:
        vmem_phys = (64 << 20) if dual_core else (128 << 20)

    # Scoped request: generous on 128-MiB parts, conservative on 64-MiB v7x.
    vmem_limit = min(48 << 20, max(16 << 20, vmem_phys // 2 - (4 << 20)))
    # 2x(in+out) double-buffered = 4 blocks; keep ~2 blocks of headroom for
    # roll/select temporaries and compiler scratch.
    soft_max_block = vmem_limit // 6
    hard_max_block = vmem_limit // 5
    return dual_core, vmem_limit, soft_max_block, hard_max_block


def _pick_tc(nc, plane_bytes, soft_max_bytes, hard_max_bytes, dual_core):
    """Pick planes-per-block: sublane-aligned (or full dim), VMEM-safe."""
    def cdiv(a, b):
        return -(-a // b)

    cands = list(range(8, nc + 1, 8))      # multiples of 8 (sublane aligned)
    if nc not in cands:
        cands.append(nc)                   # full dim is always layout-legal

    fitting = [t for t in cands if t * plane_bytes <= soft_max_bytes]
    if not fitting:
        smallest = min(cands)
        if smallest * plane_bytes <= hard_max_bytes:
            fitting = [smallest]
        else:
            return None                    # needs the H-tiled halo path (TODO)

    best = max(fitting)                    # single-TC: biggest block that fits
    if dual_core:
        # Prefer an even grid (>= 2) so both TensorCores get equal work, as
        # long as the block doesn't shrink below half the single-core choice.
        even = [t for t in fitting
                if cdiv(nc, t) >= 2 and cdiv(nc, t) % 2 == 0 and 2 * t >= best]
        if even:
            best = max(even)
    return best


def spblock3(x, kernel=KERNEL):
    """x: (N, C, H, W) float32  ->  (N, C, H, W) float32."""
    assert kernel % 2 == 1, "SPBlock3 Pallas kernel assumes an odd pooling kernel"
    N, C, H, W = x.shape
    nc, hw = N * C, H * W
    itemsize = jnp.dtype(x.dtype).itemsize
    hw_p = ((hw + 127) // 128) * 128       # lane-dense, multiple of 128

    dual_core, vmem_limit, soft_max, hard_max = _chip_config()
    tc = _pick_tc(nc, hw_p * itemsize, soft_max, hard_max, dual_core)
    if tc is None:
        # TODO(synk): implement an H-tiled halo Pallas path for very large
        # planes; fall back to plain JAX to avoid a VMEM OOM for now.
        return spblock3_reference(x, kernel)

    grid = -(-nc // tc)

    x_flat = x.reshape(nc, hw)
    if hw_p != hw:
        x_flat = jnp.pad(x_flat, ((0, 0), (0, hw_p - hw)))

    # Tiny precomputed (w, h) lane coordinates (padded lanes are don't-care).
    lane = jnp.arange(hw_p, dtype=jnp.int32)
    coords = jnp.stack([jnp.where(lane < hw, lane % W, -1),
                        jnp.where(lane < hw, lane // W, -1)], axis=0)  # (2, hw_p)

    out_flat = pl.pallas_call(
        functools.partial(_spblock3_kernel, kernel=kernel, H=H, W=W),
        out_shape=jax.ShapeDtypeStruct((nc, hw_p), x.dtype),
        grid_spec=pltpu.PrefetchScalarGridSpec(
            num_scalar_prefetch=0,
            grid=(grid,),
            in_specs=[pl.BlockSpec((2, hw_p), lambda i: (0, 0)),
                      pl.BlockSpec((tc, hw_p), lambda i: (i, 0))],
            out_specs=pl.BlockSpec((tc, hw_p), lambda i: (i, 0)),
        ),
        compiler_params=pltpu.CompilerParams(
            dimension_semantics=("parallel",),
            vmem_limit_bytes=vmem_limit,
        ),
        cost_estimate=pl.CostEstimate(
            flops=4 * kernel * nc * hw_p,          # adds + compares + selects
            transcendentals=0,
            bytes_accessed=2 * nc * hw_p * itemsize + 2 * hw_p * 4,
        ),
    )(coords, x_flat)

    if hw_p != hw:
        out_flat = out_flat[:, :hw]
    return out_flat.reshape(N, C, H, W)


def spblock3_reference(x, kernel=KERNEL):
    """Plain-JAX reference (reduce_window with zero padding, divide by k)."""
    p = kernel // 2
    sum_h = lax.reduce_window(
        x, 0.0, lax.add,
        window_dimensions=(1, 1, 1, kernel),
        window_strides=(1, 1, 1, 1),
        padding=((0, 0), (0, 0), (0, 0), (p, p)))
    sum_v = lax.reduce_window(
        x, 0.0, lax.add,
        window_dimensions=(1, 1, kernel, 1),
        window_strides=(1, 1, 1, 1),
        padding=((0, 0), (0, 0), (p, p), (0, 0)))
    return (sum_h + sum_v) / kernel


if __name__ == "__main__":
    key = jax.random.PRNGKey(0)
    N, C, H, W = 2, 4, 16, 16
    x = jax.random.normal(key, (N, C, H, W), dtype=jnp.float32)

    out = spblock3(x)
    out = jax.block_until_ready(out)

    ref = spblock3_reference(x)
    assert out.shape == (N, C, H, W)
    assert jnp.allclose(out, ref, atol=1e-5, rtol=1e-5), "mismatch vs reference"

    print("KERNEL_OK")
</pallas_src>

<mosaic_0001>
module attributes {stable_mosaic.version = 11 : i64} {
  func.func @_spblock3_kernel(%arg0: i32, %arg1: memref<2x256xi32, #tpu.memory_space<vmem>>, %arg2: memref<8x256xf32, #tpu.memory_space<vmem>>, %arg3: memref<8x256xf32, #tpu.memory_space<vmem>>) attributes {dimension_semantics = [#tpu.dimension_semantics<parallel>], iteration_bounds = array<i64: 1>, scalar_prefetch = 0 : i64, scratch_operands = 0 : i64, tpu.core_type = #tpu.core_type<tc>, window_params = [{pipeline_mode = #tpu.pipeline_mode<synchronous>, transform_indices = @transform_0, window_bounds = array<i64: 2, 256>}, {transform_indices = @transform_1, window_bounds = array<i64: 8, 256>}, {transform_indices = @transform_2, window_bounds = array<i64: 8, 256>}]} {
    %c0 = arith.constant 0 : index
    %c0_0 = arith.constant 0 : index
    %0 = vector.load %arg2[%c0, %c0_0] : memref<8x256xf32, #tpu.memory_space<vmem>>, vector<8x256xf32>
    %c0_1 = arith.constant 0 : index
    %c0_2 = arith.constant 0 : index
    %1 = vector.load %arg1[%c0_1, %c0_2] : memref<2x256xi32, #tpu.memory_space<vmem>>, vector<1x256xi32>
    %2 = vector.shape_cast %1 : vector<1x256xi32> to vector<1x256xi32>
    %3 = vector.broadcast %2 : vector<1x256xi32> to vector<8x256xi32>
    %c1 = arith.constant 1 : index
    %c0_3 = arith.constant 0 : index
    %4 = vector.load %arg1[%c1, %c0_3] : memref<2x256xi32, #tpu.memory_space<vmem>>, vector<1x256xi32>
    %5 = vector.shape_cast %4 : vector<1x256xi32> to vector<1x256xi32>
    %6 = vector.broadcast %5 : vector<1x256xi32> to vector<8x256xi32>
    %7 = arith.addf %0, %0 : vector<8x256xf32>
    %c255_i32 = arith.constant 255 : i32
    %8 = tpu.dynamic_rotate %0 by %c255_i32 dim 1 : vector<8x256xf32>, i32 -> vector<8x256xf32>
    %c15_i32 = arith.constant 15 : i32
    %9 = vector.broadcast %c15_i32 : i32 to vector<8x256xi32>
    %10 = arith.cmpi slt, %3, %9 : vector<8x256xi32>
    %cst = arith.constant 0.000000e+00 : f32
    %11 = vector.broadcast %cst : f32 to vector<8x256xf32>
    %12 = arith.select %10, %8, %11 : vector<8x256xi1>, vector<8x256xf32>
    %13 = arith.addf %7, %12 : vector<8x256xf32>
    %c240_i32 = arith.constant 240 : i32
    %14 = tpu.dynamic_rotate %0 by %c240_i32 dim 1 : vector<8x256xf32>, i32 -> vector<8x256xf32>
    %c15_i32_4 = arith.constant 15 : i32
    %15 = vector.broadcast %c15_i32_4 : i32 to vector<8x256xi32>
    %16 = arith.cmpi slt, %6, %15 : vector<8x256xi32>
    %cst_5 = arith.constant 0.000000e+00 : f32
    %17 = vector.broadcast %cst_5 : f32 to vector<8x256xf32>
    %18 = arith.select %16, %14, %17 : vector<8x256xi1>, vector<8x256xf32>
    %19 = arith.addf %13, %18 : vector<8x256xf32>
    %c1_i32 = arith.constant 1 : i32
    %20 = tpu.dynamic_rotate %0 by %c1_i32 dim 1 : vector<8x256xf32>, i32 -> vector<8x256xf32>
    %c1_i32_6 = arith.constant 1 : i32
    %21 = vector.broadcast %c1_i32_6 : i32 to vector<8x256xi32>
    %22 = arith.cmpi sge, %3, %21 : vector<8x256xi32>
    %cst_7 = arith.constant 0.000000e+00 : f32
    %23 = vector.broadcast %cst_7 : f32 to vector<8x256xf32>
    %24 = arith.select %22, %20, %23 : vector<8x256xi1>, vector<8x256xf32>
    %25 = arith.addf %19, %24 : vector<8x256xf32>
    %c16_i32 = arith.constant 16 : i32
    %26 = tpu.dynamic_rotate %0 by %c16_i32 dim 1 : vector<8x256xf32>, i32 -> vector<8x256xf32>
    %c1_i32_8 = arith.constant 1 : i32
    %27 = vector.broadcast %c1_i32_8 : i32 to vector<8x256xi32>
    %28 = arith.cmpi sge, %6, %27 : vector<8x256xi32>
    %cst_9 = arith.constant 0.000000e+00 : f32
    %29 = vector.broadcast %cst_9 : f32 to vector<8x256xf32>
    %30 = arith.select %28, %26, %29 : vector<8x256xi1>, vector<8x256xf32>
    %31 = arith.addf %25, %30 : vector<8x256xf32>
    %c254_i32 = arith.constant 254 : i32
    %32 = tpu.dynamic_rotate %0 by %c254_i32 dim 1 : vector<8x256xf32>, i32 -> vector<8x256xf32>
    %c14_i32 = arith.constant 14 : i32
    %33 = vector.broadcast %c14_i32 : i32 to vector<8x256xi32>
    %34 = arith.cmpi slt, %3, %33 : vector<8x256xi32>
    %cst_10 = arith.constant 0.000000e+00 : f32
    %35 = vector.broadcast %cst_10 : f32 to vector<8x256xf32>
    %36 = arith.select %34, %32, %35 : vector<8x256xi1>, vector<8x256xf32>
    %37 = arith.addf %31, %36 : vector<8x256xf32>
    %c224_i32 = arith.constant 224 : i32
    %38 = tpu.dynamic_rotate %0 by %c224_i32 dim 1 : vector<8x256xf32>, i32 -> vector<8x256xf32>
    %c14_i32_11 = arith.constant 14 : i32
    %39 = vector.broadcast %c14_i32_11 : i32 to vector<8x256xi32>
    %40 = arith.cmpi slt, %6, %39 : vector<8x256xi32>
    %cst_12 = arith.constant 0.000000e+00 : f32
    %41 = vector.broadcast %cst_12 : f32 to vector<8x256xf32>
    %42 = arith.select %40, %38, %41 : vector<8x256xi1>, vector<8x256xf32>
    %43 = arith.addf %37, %42 : vector<8x256xf32>
    %c2_i32 = arith.constant 2 : i32
    %44 = tpu.dynamic_rotate %0 by %c2_i32 dim 1 : vector<8x256xf32>, i32 -> vector<8x256xf32>
    %c2_i32_13 = arith.constant 2 : i32
    %45 = vector.broadcast %c2_i32_13 : i32 to vector<8x256xi32>
    %46 = arith.cmpi sge, %3, %45 : vector<8x256xi32>
    %cst_14 = arith.constant 0.000000e+00 : f32
    %47 = vector.broadcast %cst_14 : f32 to vector<8x256xf32>
    %48 = arith.select %46, %44, %47 : vector<8x256xi1>, vector<8x256xf32>
    %49 = arith.addf %43, %48 : vector<8x256xf32>
    %c32_i32 = arith.constant 32 : i32
    %50 = tpu.dynamic_rotate %0 by %c32_i32 dim 1 : vector<8x256xf32>, i32 -> vector<8x256xf32>
    %c2_i32_15 = arith.constant 2 : i32
    %51 = vector.broadcast %c2_i32_15 : i32 to vector<8x256xi32>
    %52 = arith.cmpi sge, %6, %51 : vector<8x256xi32>
    %cst_16 = arith.constant 0.000000e+00 : f32
    %53 = vector.broadcast %cst_16 : f32 to vector<8x256xf32>
    %54 = arith.select %52, %50, %53 : vector<8x256xi1>, vector<8x256xf32>
    %55 = arith.addf %49, %54 : vector<8x256xf32>
    %cst_17 = arith.constant 2.000000e-01 : f32
    %56 = vector.broadcast %cst_17 : f32 to vector<8x256xf32>
    %57 = arith.mulf %55, %56 : vector<8x256xf32>
    %c0_18 = arith.constant 0 : index
    %c0_19 = arith.constant 0 : index
    %58 = vector.load %arg3[%c0_18, %c0_19] : memref<8x256xf32, #tpu.memory_space<vmem>>, vector<8x256xf32>
    tpu.vector_store %arg3[%c0_18, %c0_19], %57 {strides = array<i32>} : memref<8x256xf32, #tpu.memory_space<vmem>>, vector<8x256xf32>,
    return
  }
  func.func @transform_0(%arg0: i32) -> (i32, i32) {
    %c0_i32 = arith.constant 0 : i32
    %c0_i32_0 = arith.constant 0 : i32
    %c0_i32_1 = arith.constant 0 : i32
    return %c0_i32, %c0_i32_0 : i32, i32
  }
  func.func @transform_1(%arg0: i32) -> (i32, i32) {
    %c0_i32 = arith.constant 0 : i32
    %c0_i32_0 = arith.constant 0 : i32
    return %arg0, %c0_i32 : i32, i32
  }
  func.func @transform_2(%arg0: i32) -> (i32, i32) {
    %c0_i32 = arith.constant 0 : i32
    %c0_i32_0 = arith.constant 0 : i32
    return %arg0, %c0_i32 : i32, i32
  }
}

</mosaic_0001>

<llo_original>
// kernel: tpu_custom_call.1
$region0: #{tpu_custom_call.1}
  #allocation0 [shape = 'u32[]', space=smem, size = 0x4, offset = 0x4, fixed_abs, tag = 'smem constant byte address 0x4 - core index']
  #allocation1 [shape = 'u32[144,128]{1,0:T(1,128)}', space=vmem, size = 0x12000, scoped, tag = 'internal scratch']
  %s0 = inlined_call_operand.hbm [shape: s32[2,256], index: 0, kind: input, shape index: {}]
  %s1 = inlined_call_operand.hbm [shape: f32[8,256], index: 1, kind: input, shape index: {}]
  %s2 = inlined_call_operand.hbm [shape: f32[8,256], index: 2, kind: output, shape index: {}]
  %s3 = sld [smem:[#allocation0]]
  $region26: #{tpu_custom_call.1} parent=0
    _
  %s5 = ssub.s32 1, %s3
  %s6 = scalar_select 0, %s5, %s3
  $region1: #{tpu_custom_call.1} parent=0
    #allocation2 [shape = 'u8[2048]{0}', space=vmem, size = 0x800, scoped, tag = 'input window, operand 0, single buffered']
    #allocation3 [shape = 's32[1]{0}', space=sflag, size = 0x4, scoped, tag = 'scoped memory for tpu_custom_call.1']
    #allocation4 [shape = 's32[1]{0}', space=sflag, size = 0x4, scoped, tag = 'scoped memory for tpu_custom_call.1']
    #allocation5 [shape = 'u8[8192]{0}', space=vmem, size = 0x2000, scoped, tag = 'input window, operand 1, single buffered']
    #allocation6 [shape = 's32[1]{0}', space=sflag, size = 0x4, scoped, tag = 'scoped memory for tpu_custom_call.1']
    #allocation7 [shape = 'u8[8192]{0}', space=vmem, size = 0x2000, scoped, tag = 'output window, operand 0, single buffered']
    %7 = vsyncpa [#allocation3], 0
    %8 = vsyncpa [#allocation6], 0
    %9 = vsyncpa [#allocation4], 0
    // Predicated region
    $region2: #{tpu_custom_call.1} parent=1 // pred_check
      _
    $region3: #{tpu_custom_call.1} parent=1 // pred_check_branch
      %11 = sbr.rel (0) target = $region5
    $region4: #{tpu_custom_call.1} parent=1 // pred_region
      %s13 = ssub.s32 64, 64
      %14 = vsyncadd [#allocation3], %s13
      %s16 = sshll.u32 [#allocation2], 4
      %s17 = int_to_ptr.vmem [resolvable:$true] %s16
      %19 = dma.hbm_to_vmem [thread:$0]  %s0, 64, %s17, [#allocation3]
    $region5: #{tpu_custom_call.1} parent=1 // pred_fallthru
      _
    // Predicated region
    $region6: #{tpu_custom_call.1} parent=1 // pred_check
      _
    $region7: #{tpu_custom_call.1} parent=1 // pred_check_branch
      %21 = sbr.rel (0) target = $region9
    $region8: #{tpu_custom_call.1} parent=1 // pred_region
      %s23 = ssub.s32 256, 256
      %24 = vsyncadd [#allocation6], %s23
      %s26 = sshll.u32 [#allocation5], 4
      %s27 = int_to_ptr.vmem [resolvable:$true] %s26
      %29 = dma.hbm_to_vmem [thread:$0]  %s1, 256, %s27, [#allocation6]
    $region9: #{tpu_custom_call.1} parent=1 // pred_fallthru
      _
    // Predicated region
    $region10: #{tpu_custom_call.1} parent=1 // pred_check
      _
    $region11: #{tpu_custom_call.1} parent=1 // pred_check_branch
      %31 = sbr.rel (0) target = $region13
    $region12: #{tpu_custom_call.1} parent=1 // pred_region
      %32 = dma.done [#allocation3], 64
    $region13: #{tpu_custom_call.1} parent=1 // pred_fallthru
      _
    // Predicated region
    $region14: #{tpu_custom_call.1} parent=1 // pred_check
      _
    $region15: #{tpu_custom_call.1} parent=1 // pred_check_branch
      %34 = sbr.rel (0) target = $region17
    $region16: #{tpu_custom_call.1} parent=1 // pred_region
      %35 = dma.done [#allocation6], 256
    $region17: #{tpu_custom_call.1} parent=1 // pred_fallthru
      _
    %v36 = vld [vmem:[#allocation5] sm:$0xff]
    %v37 = vld [vmem:[#allocation5 + $0x8] sm:$0xff]
    %v38 = vld [vmem:[#allocation2] ss:$2 sm:$0x3]
    %v39 = vlaneseq
    %v40 = vshrl.u32 %v39, 7
    %v41 = vsub.s32 0, %v40
    %v42 = vrot.slane %v38, %v41
    %v43 = vlaneseq
    %v44 = vshrl.u32 %v43, 7
    %v45 = vsub.s32 1, %v44
    %v46 = vrot.slane %v38, %v45
    %s47 = scalar_lea.vmem [#allocation2], 1
    %v48 = vld [vmem:[%s47] ss:$2 sm:$0x3]
    %v49 = vlaneseq
    %v50 = vshrl.u32 %v49, 7
    %v51 = vsub.s32 0, %v50
    %v52 = vrot.slane %v48, %v51
    %v53 = vlaneseq
    %v54 = vshrl.u32 %v53, 7
    %v55 = vsub.s32 1, %v54
    %v56 = vrot.slane %v48, %v55
    %v57 = vadd.f32 %v36, %v36
    %v58 = vadd.f32 %v37, %v37
    %59 = vrot.lane.b32.xlu0 %v36, 127
    %v60 = vpop.permute.xlu0 %59
    %61 = vrot.lane.b32.xlu0 %v37, 127
    %v62 = vpop.permute.xlu0 %61
    %v63 = vlaneseq
    %v64 = vand.u32 %v63, 127
    %vm65 = vcmp.lt.s32.totalorder %v64, 127
    %v66 = vsel %vm65, %v60, %v62
    %v67 = vsel %vm65, %v62, %v60
    %vm68 = vcmp.lt.s32.totalorder %v42, 15
    %vm69 = vcmp.lt.s32.totalorder %v46, 15
    %v70 = vsel %vm68, %v66, 0.0
    %v71 = vsel %vm69, %v67, 0.0
    %v72 = vadd.f32 %v57, %v70
    %v73 = vadd.f32 %v58, %v71
    %74 = vrot.lane.b32.xlu0 %v36, 112
    %v75 = vpop.permute.xlu0 %74
    %76 = vrot.lane.b32.xlu0 %v37, 112
    %v77 = vpop.permute.xlu0 %76
    %vm78 = vcmp.lt.s32.totalorder %v64, 112
    %v79 = vsel %vm78, %v75, %v77
    %v80 = vsel %vm78, %v77, %v75
    %vm81 = vcmp.lt.s32.totalorder %v52, 15
    %vm82 = vcmp.lt.s32.totalorder %v56, 15
    %v83 = vsel %vm81, %v79, 0.0
    %v84 = vsel %vm82, %v80, 0.0
    %v85 = vadd.f32 %v72, %v83
    %v86 = vadd.f32 %v73, %v84
    %87 = vrot.lane.b32.xlu0 %v36, 1
    %v88 = vpop.permute.xlu0 %87
    %89 = vrot.lane.b32.xlu0 %v37, 1
    %v90 = vpop.permute.xlu0 %89
    %vm91 = vcmp.lt.s32.totalorder %v64, 1
    %v92 = vsel %vm91, %v88, %v90
    %v93 = vsel %vm91, %v90, %v88
    %vm94 = vcmp.ge.s32.totalorder %v42, 1
    %vm95 = vcmp.ge.s32.totalorder %v46, 1
    %v96 = vsel %vm94, %v93, 0.0
    %v97 = vsel %vm95, %v92, 0.0
    %v98 = vadd.f32 %v85, %v96
    %v99 = vadd.f32 %v86, %v97
    %100 = vrot.lane.b32.xlu0 %v36, 16
    %v101 = vpop.permute.xlu0 %100
    %102 = vrot.lane.b32.xlu0 %v37, 16
    %v103 = vpop.permute.xlu0 %102
    %vm104 = vcmp.lt.s32.totalorder %v64, 16
    %v105 = vsel %vm104, %v101, %v103
    %v106 = vsel %vm104, %v103, %v101
    %vm107 = vcmp.ge.s32.totalorder %v52, 1
    %vm108 = vcmp.ge.s32.totalorder %v56, 1
    %v109 = vsel %vm107, %v106, 0.0
    %v110 = vsel %vm108, %v105, 0.0
    %v111 = vadd.f32 %v98, %v109
    %v112 = vadd.f32 %v99, %v110
    %113 = vrot.lane.b32.xlu0 %v36, 126
    %v114 = vpop.permute.xlu0 %113
    %115 = vrot.lane.b32.xlu0 %v37, 126
    %v116 = vpop.permute.xlu0 %115
    %vm117 = vcmp.lt.s32.totalorder %v64, 126
    %v118 = vsel %vm117, %v114, %v116
    %v119 = vsel %vm117, %v116, %v114
    %vm120 = vcmp.lt.s32.totalorder %v42, 14
    %vm121 = vcmp.lt.s32.totalorder %v46, 14
    %v122 = vsel %vm120, %v118, 0.0
    %v123 = vsel %vm121, %v119, 0.0
    %v124 = vadd.f32 %v111, %v122
    %v125 = vadd.f32 %v112, %v123
    %126 = vrot.lane.b32.xlu0 %v36, 96
    %v127 = vpop.permute.xlu0 %126
    %128 = vrot.lane.b32.xlu0 %v37, 96
    %v129 = vpop.permute.xlu0 %128
    %vm130 = vcmp.lt.s32.totalorder %v64, 96
    %v131 = vsel %vm130, %v127, %v129
    %v132 = vsel %vm130, %v129, %v127
    %vm133 = vcmp.lt.s32.totalorder %v52, 14
    %vm134 = vcmp.lt.s32.totalorder %v56, 14
    %v135 = vsel %vm133, %v131, 0.0
    %v136 = vsel %vm134, %v132, 0.0
    %v137 = vadd.f32 %v124, %v135
    %v138 = vadd.f32 %v125, %v136
    %139 = vrot.lane.b32.xlu0 %v36, 2
    %v140 = vpop.permute.xlu0 %139
    %141 = vrot.lane.b32.xlu0 %v37, 2
    %v142 = vpop.permute.xlu0 %141
    %vm143 = vcmp.lt.s32.totalorder %v64, 2
    %v144 = vsel %vm143, %v140, %v142
    %v145 = vsel %vm143, %v142, %v140
    %vm146 = vcmp.ge.s32.totalorder %v42, 2
    %vm147 = vcmp.ge.s32.totalorder %v46, 2
    %v148 = vsel %vm146, %v145, 0.0
    %v149 = vsel %vm147, %v144, 0.0
    %v150 = vadd.f32 %v137, %v148
    %v151 = vadd.f32 %v138, %v149
    %152 = vrot.lane.b32.xlu0 %v36, 32
    %v153 = vpop.permute.xlu0 %152
    %154 = vrot.lane.b32.xlu0 %v37, 32
    %v155 = vpop.permute.xlu0 %154
    %vm156 = vcmp.lt.s32.totalorder %v64, 32
    %v157 = vsel %vm156, %v153, %v155
    %v158 = vsel %vm156, %v155, %v153
    %vm159 = vcmp.ge.s32.totalorder %v52, 2
    %vm160 = vcmp.ge.s32.totalorder %v56, 2
    %v161 = vsel %vm159, %v158, 0.0
    %v162 = vsel %vm160, %v157, 0.0
    %v163 = vadd.f32 %v150, %v161
    %v164 = vadd.f32 %v151, %v162
    %v165 = vmul.f32 %v163, 0.2
    %v166 = vmul.f32 %v164, 0.2
    %167 = vst [vmem:[#allocation7] sm:$0xff] %v165
    %168 = vst [vmem:[#allocation7 + $0x8] sm:$0xff] %v166
    // Predicated region
    $region18: #{tpu_custom_call.1} parent=1 // pred_check
      _
    $region19: #{tpu_custom_call.1} parent=1 // pred_check_branch
      %170 = sbr.rel (0) target = $region21
    $region20: #{tpu_custom_call.1} parent=1 // pred_region
      %s172 = ssub.s32 256, 256
      %173 = vsyncadd [#allocation4], %s172
      %s175 = sshll.u32 [#allocation7], 4
      %s176 = int_to_ptr.vmem [resolvable:$true] %s175
      %178 = dma.vmem_to_hbm [thread:$0]  %s176, 256, %s2, [#allocation4]
    $region21: #{tpu_custom_call.1} parent=1 // pred_fallthru
      _
    // Predicated region
    $region22: #{tpu_custom_call.1} parent=1 // pred_check
      _
    $region23: #{tpu_custom_call.1} parent=1 // pred_check_branch
      %180 = sbr.rel (0) target = $region25
    $region24: #{tpu_custom_call.1} parent=1 // pred_region
      %181 = dma.done [#allocation4], 256
    $region25: #{tpu_custom_call.1} parent=1 // pred_fallthru
      _
    %182 = vsyncpa [#allocation3], 1
    %183 = vsyncpa [#allocation6], 1
    %184 = vsyncpa [#allocation4], 1

</llo_original>
